<compile_context>
chip_gen: v6e
topology: v6e:2x2x1
jax: 0.10.0
libtpu: 0.0.40
codegen_flags: <defaults>
</compile_context>

<pallas_src>
import jax
import jax.numpy as jnp
from jax.experimental import pallas as pl
from jax.experimental.pallas import tpu as pltpu


_VMEM_LIMIT_BYTES = 48 * 1024 * 1024   # fits v7x's 64 MiB physical VMEM with headroom
_TILE_BUDGET_BYTES = 36 * 1024 * 1024  # budget for the double-buffered x/out blocks


def _round_up(a, m):
    return ((a + m - 1) // m) * m


def _convt_matmul_kernel(x_ref, w_ref, b_ref, o_ref):
    # x_ref: (1, Cin, tm)  w_ref: (Nout, Cin)  b_ref: (Nout, 1)  o_ref: (1, Nout, tm)
    acc = jnp.dot(w_ref[...], x_ref[0], preferred_element_type=jnp.float32)
    o_ref[0] = (acc + b_ref[...]).astype(o_ref.dtype)


def upsample_conv_transpose2d(x, w, b, *, kernel, stride):
    """ConvTranspose2d(input_dim, output_dim, kernel_size=kernel, stride=stride).

    x: (N, Cin, H, W)  NCHW
    w: (Cin, Cout, kH, kW)  (PyTorch ConvTranspose2d weight layout)
    b: (Cout,)
    returns: (N, Cout, (H-1)*stride + kernel, (W-1)*stride + kernel)
    """
    assert kernel == stride, "only the non-overlapping (kernel == stride) case is implemented"
    N, Cin, H, W = x.shape
    Cin_w, Cout, kH, kW = w.shape
    assert Cin == Cin_w and kH == kernel and kW == kernel

    HW = H * W
    Nout = Cout * kH * kW
    itemsize = jnp.dtype(x.dtype).itemsize

    # --- choose the spatial tile tm (lane axis of the stored output) ---
    w_bytes = (Nout * Cin + Nout) * itemsize
    per_elem = 2 * itemsize * (Cin + Nout)              # double-buffered x + out blocks
    tm_cap = max(128, ((_TILE_BUDGET_BYTES - w_bytes) // per_elem) // 128 * 128)
    tm = min(tm_cap, _round_up(HW, 128))
    # keep a few grid steps so both v7x TensorCores get work even at small batch
    min_steps = max(1, 4 // max(N, 1))
    if min_steps > 1:
        tm = min(tm, max(128, _round_up(pl.cdiv(HW, min_steps), 128)))
    HW_pad = _round_up(HW, tm)

    # --- operand glue: reshapes only, no transpose pass over the activations ---
    x3 = x.reshape(N, Cin, HW)
    if HW_pad != HW:
        x3 = jnp.pad(x3, ((0, 0), (0, 0), (0, HW_pad - HW)))
    w_t = w.reshape(Cin, Nout).T                        # (Nout, Cin); row = cout*kH*kW + kh*kW + kw
    b_col = jnp.repeat(b, kH * kW).reshape(Nout, 1)     # bias per output row

    grid = (N, HW_pad // tm)
    cost = pl.CostEstimate(
        flops=2 * N * HW_pad * Cin * Nout,
        transcendentals=0,
        bytes_accessed=itemsize * (N * HW_pad * (Cin + Nout) + Nout * Cin + Nout),
    )

    y = pl.pallas_call(
        _convt_matmul_kernel,
        out_shape=jax.ShapeDtypeStruct((N, Nout, HW_pad), x.dtype),
        grid_spec=pltpu.PrefetchScalarGridSpec(
            num_scalar_prefetch=0,
            grid=grid,
            in_specs=[
                pl.BlockSpec((1, Cin, tm), lambda n, i: (n, 0, i)),
                pl.BlockSpec((Nout, Cin), lambda n, i: (0, 0),
                             pipeline_mode=pl.Buffered(1)),   # grid-invariant: single buffer
                pl.BlockSpec((Nout, 1), lambda n, i: (0, 0),
                             pipeline_mode=pl.Buffered(1)),
            ],
            out_specs=pl.BlockSpec((1, Nout, tm), lambda n, i: (n, 0, i)),
        ),
        compiler_params=pltpu.CompilerParams(
            dimension_semantics=("parallel", "parallel"),
            vmem_limit_bytes=_VMEM_LIMIT_BYTES,
        ),
        cost_estimate=cost,
    )(x3, w_t, b_col)

    # --- scatter: each pixel's (Cout, kH, kW) contribution lands in a disjoint block ---
    if HW_pad != HW:
        y = y[:, :, :HW]
    y = y.reshape(N, Cout, kH, kW, H, W)
    y = jnp.transpose(y, (0, 1, 4, 2, 5, 3))            # (N, Cout, H, kH, W, kW)
    Hout = (H - 1) * stride + kernel
    Wout = (W - 1) * stride + kernel
    return y.reshape(N, Cout, Hout, Wout)


def _reference_conv_transpose2d(x, w, b, *, stride):
    """Pure-JAX reference for ConvTranspose2d (no padding, no output_padding)."""
    Cin, Cout, kH, kW = w.shape
    w_conv = jnp.transpose(jnp.flip(w, axis=(2, 3)), (1, 0, 2, 3))  # (Cout, Cin, kH, kW)
    out = jax.lax.conv_general_dilated(
        x, w_conv,
        window_strides=(1, 1),
        padding=[(kH - 1, kH - 1), (kW - 1, kW - 1)],
        lhs_dilation=(stride, stride),
        dimension_numbers=("NCHW", "OIHW", "NCHW"),
    )
    return out + b[None, :, None, None]


if __name__ == "__main__":
    # Upsample(input_dim=4, output_dim=8, kernel=2, stride=2) on a small input.
    N, Cin, H, W = 2, 4, 16, 16
    Cout, kernel, stride = 8, 2, 2

    key = jax.random.PRNGKey(0)
    kx, kw, kb = jax.random.split(key, 3)
    x = jax.random.normal(kx, (N, Cin, H, W), dtype=jnp.float32)
    # PyTorch ConvTranspose2d weight shape: (in_channels, out_channels, kH, kW)
    w = 0.1 * jax.random.normal(kw, (Cin, Cout, kernel, kernel), dtype=jnp.float32)
    b = 0.1 * jax.random.normal(kb, (Cout,), dtype=jnp.float32)

    out = upsample_conv_transpose2d(x, w, b, kernel=kernel, stride=stride)
    out = jax.block_until_ready(out)

    ref = _reference_conv_transpose2d(x, w, b, stride=stride)
    assert out.shape == (N, Cout, (H - 1) * stride + kernel, (W - 1) * stride + kernel)
    assert jnp.allclose(out, ref, atol=1e-4, rtol=1e-4), "mismatch vs reference"

    print("KERNEL_OK")
</pallas_src>

<mosaic_0001>
module attributes {stable_mosaic.version = 11 : i64} {
  func.func @_convt_matmul_kernel(%arg0: i32, %arg1: i32, %arg2: memref<1x4x128xf32, #tpu.memory_space<vmem>>, %arg3: memref<32x4xf32, #tpu.memory_space<vmem>>, %arg4: memref<32x1xf32, #tpu.memory_space<vmem>>, %arg5: memref<1x32x128xf32, #tpu.memory_space<vmem>>) attributes {dimension_semantics = [#tpu.dimension_semantics<parallel>, #tpu.dimension_semantics<parallel>], iteration_bounds = array<i64: 2, 2>, scalar_prefetch = 0 : i64, scratch_operands = 0 : i64, tpu.core_type = #tpu.core_type<tc>, window_params = [{transform_indices = @transform_0, window_bounds = array<i64: 1, 4, 128>}, {pipeline_mode = #tpu.pipeline_mode<synchronous>, transform_indices = @transform_1, window_bounds = array<i64: 32, 4>}, {pipeline_mode = #tpu.pipeline_mode<synchronous>, transform_indices = @transform_2, window_bounds = array<i64: 32, 1>}, {transform_indices = @transform_3, window_bounds = array<i64: 1, 32, 128>}]} {
    %c0 = arith.constant 0 : index
    %c0_0 = arith.constant 0 : index
    %0 = vector.load %arg3[%c0, %c0_0] : memref<32x4xf32, #tpu.memory_space<vmem>>, vector<32x4xf32>
    %c0_1 = arith.constant 0 : index
    %c0_2 = arith.constant 0 : index
    %c0_3 = arith.constant 0 : index
    %1 = vector.load %arg2[%c0_1, %c0_2, %c0_3] : memref<1x4x128xf32, #tpu.memory_space<vmem>>, vector<1x4x128xf32>
    %2 = vector.shape_cast %1 : vector<1x4x128xf32> to vector<4x128xf32>
    %cst = arith.constant dense<0.000000e+00> : vector<32x128xf32>
    %3 = tpu.matmul %0, %2, %cst {dimension_numbers = #tpu.dot_dimension_numbers<[1], [0], [0], [1], [0, 0, 1, 1], [], []>} : vector<32x4xf32>, vector<4x128xf32>, vector<32x128xf32> -> vector<32x128xf32>
    %c0_4 = arith.constant 0 : index
    %c0_5 = arith.constant 0 : index
    %4 = vector.load %arg4[%c0_4, %c0_5] : memref<32x1xf32, #tpu.memory_space<vmem>>, vector<32x1xf32>
    %5 = vector.broadcast %4 : vector<32x1xf32> to vector<32x128xf32>
    %6 = arith.addf %3, %5 : vector<32x128xf32>
    %c0_6 = arith.constant 0 : index
    %c0_7 = arith.constant 0 : index
    %c0_8 = arith.constant 0 : index
    %7 = vector.load %arg5[%c0_6, %c0_7, %c0_8] : memref<1x32x128xf32, #tpu.memory_space<vmem>>, vector<1x32x128xf32>
    %8 = vector.shape_cast %7 : vector<1x32x128xf32> to vector<32x128xf32>
    %9 = vector.shape_cast %6 : vector<32x128xf32> to vector<1x32x128xf32>
    tpu.vector_store %arg5[%c0_6, %c0_7, %c0_8], %9 {strides = array<i32>} : memref<1x32x128xf32, #tpu.memory_space<vmem>>, vector<1x32x128xf32>,
    return
  }
  func.func @transform_0(%arg0: i32, %arg1: i32) -> (i32, i32, i32) {
    %c0_i32 = arith.constant 0 : i32
    %c0_i32_0 = arith.constant 0 : i32
    return %arg0, %c0_i32, %arg1 : i32, i32, i32
  }
  func.func @transform_1(%arg0: i32, %arg1: i32) -> (i32, i32) {
    %c0_i32 = arith.constant 0 : i32
    %c0_i32_0 = arith.constant 0 : i32
    %c0_i32_1 = arith.constant 0 : i32
    return %c0_i32, %c0_i32_0 : i32, i32
  }
  func.func @transform_2(%arg0: i32, %arg1: i32) -> (i32, i32) {
    %c0_i32 = arith.constant 0 : i32
    %c0_i32_0 = arith.constant 0 : i32
    %c0_i32_1 = arith.constant 0 : i32
    return %c0_i32, %c0_i32_0 : i32, i32
  }
  func.func @transform_3(%arg0: i32, %arg1: i32) -> (i32, i32, i32) {
    %c0_i32 = arith.constant 0 : i32
    %c0_i32_0 = arith.constant 0 : i32
    return %arg0, %c0_i32, %arg1 : i32, i32, i32
  }
}

</mosaic_0001>

<llo_original>
// kernel: tpu_custom_call.1
$region0: #{tpu_custom_call.1}
  #allocation0 [shape = 'u32[]', space=smem, size = 0x4, offset = 0x4, fixed_abs, tag = 'smem constant byte address 0x4 - core index']
  #allocation1 [shape = 'u32[144,128]{1,0:T(1,128)}', space=vmem, size = 0x12000, scoped, tag = 'internal scratch']
  %s0 = inlined_call_operand.vmem [shape: f32[2,4,256], index: 0, kind: input, shape index: {}]
  %s1 = inlined_call_operand.vmem [shape: f32[32,4], index: 1, kind: input, shape index: {}]
  %s2 = inlined_call_operand.vmem [shape: f32[32,1], index: 2, kind: input, shape index: {}]
  %s3 = inlined_call_operand.hbm [shape: f32[2,32,256], index: 3, kind: output, shape index: {}]
  %s4 = sld [smem:[#allocation0]]
  $region45: #{tpu_custom_call.1} parent=0
    _
  %s6 = ssub.s32 1, %s4
  %s7 = scalar_select 0, %s6, %s4
  $region1: #{tpu_custom_call.1} parent=0
    #allocation2 [shape = 'u8[32768]{0}', space=vmem, size = 0x8000, scoped, tag = 'output window, operand 0']
    #allocation3 [shape = 's32[2]{0}', space=sflag, size = 0x8, scoped, tag = 'scoped memory for tpu_custom_call.1']
    %8 = vsyncpa [#allocation3], 0
    %s9 = scalar_lea.sflag [#allocation3], 1
    %10 = vsyncpa %s9, 0
    loop: start=0, step=1, limit=6
    $region2: #{tpu_custom_call.1} parent=1 // loop_pre_header
      _
    $region3: #{tpu_custom_call.1} parent=1 // loop_header
      %s12 = sphi 0, %s16
      %p13 = scmp.ge.s32.totalorder %s12, 6
      %s19 = sphi 0, %s31
      %s20 = sphi 0, %s27
      %s21 = sphi 0, %s19
      %s22 = sphi 0, %s20
      %s23 = sphi 0, %s21
      %s24 = sphi 0, %s22
      %s36 = sphi 0, %s38
      %s39 = sphi 0, %s36
      %s40 = sphi 0, %s39
      %s56 = sphi 0, %s40
      %s60 = sphi 0, %s60
      %s62 = sphi 0, %s60
      %s63 = sphi 0, %s62
      %s77 = sphi 0, %s63
      %s81 = sphi 0, %s81
      %s83 = sphi 0, %s81
      %s84 = sphi 0, %s83
      %s98 = sphi 0, %s84
      %s106 = sphi 0, %s108
      %s109 = sphi 0, %s106
      %s110 = sphi 0, %s109
      %s126 = sphi 0, %s110
    $region4: #{tpu_custom_call.1} parent=1 // loop_header_branch
      %15 = sbr.rel (%p13) target = $region8
    $region5: #{tpu_custom_call.1} parent=1 // loop_body
      %s17 = ssub.s32 %s12, 1
      %s18 = ssub.s32 %s12, 2
      %s25 = sadd.s32 1, %s20
      %p26 = scmp.ge.s32.totalorder %s25, 2
      %s27 = scalar_select %p26, 0, %s25
      %s28 = sadd.s32 1, %s19
      %s29 = scalar_select %p26, %s28, %s19
      %p30 = scmp.ge.s32.totalorder %s29, 2
      %s31 = scalar_select %p30, 0, %s29
      %s32 = ssub.s32 %s19, %s31
      %s33 = ssub.s32 %s20, %s27
      %s34 = sor.u32 %s32, %s33
      %p35 = scmp.eq.s32.totalorder %s34, 0
      %s37 = sadd.s32 %s36, 1
      %s38 = scalar_select %p35, %s36, %s37
      %p41 = pneg %p35
      %p42 = scmp.eq.s32.totalorder %s12, 3
      %p43 = por %p41, %p42
      %p44 = scmp.ne.s32.totalorder %s36, %s39
      %p45 = scmp.eq.s32.totalorder %s12, 0
      %p46 = por %p44, %p45
      %p47 = scmp.ne.s32.totalorder %s36, %s39
      %p48 = scmp.eq.s32.totalorder %s17, 3
      %p49 = por %p47, %p48
      %p50 = scmp.ne.s32.totalorder %s39, %s40
      %p51 = scmp.eq.s32.totalorder %s17, 0
      %p52 = por %p50, %p51
      %p53 = scmp.ne.s32.totalorder %s39, %s40
      %p54 = scmp.eq.s32.totalorder %s18, 3
      %p55 = por %p53, %p54
      %p57 = scmp.ne.s32.totalorder %s40, %s56
      %p58 = scmp.eq.s32.totalorder %s18, 0
      %p59 = por %p57, %p58
      %s61 = sadd.s32 %s60, 1
      %p64 = scmp.eq.s32.totalorder %s12, 3
      %p65 = scmp.ne.s32.totalorder %s60, %s62
      %p66 = scmp.eq.s32.totalorder %s12, 0
      %p67 = por %p65, %p66
      %p68 = scmp.ne.s32.totalorder %s60, %s62
      %p69 = scmp.eq.s32.totalorder %s17, 3
      %p70 = por %p68, %p69
      %p71 = scmp.ne.s32.totalorder %s62, %s63
      %p72 = scmp.eq.s32.totalorder %s17, 0
      %p73 = por %p71, %p72
      %p74 = scmp.ne.s32.totalorder %s62, %s63
      %p75 = scmp.eq.s32.totalorder %s18, 3
      %p76 = por %p74, %p75
      %p78 = scmp.ne.s32.totalorder %s63, %s77
      %p79 = scmp.eq.s32.totalorder %s18, 0
      %p80 = por %p78, %p79
      %s82 = sadd.s32 %s81, 1
      %p85 = scmp.eq.s32.totalorder %s12, 3
      %p86 = scmp.ne.s32.totalorder %s81, %s83
      %p87 = scmp.eq.s32.totalorder %s12, 0
      %p88 = por %p86, %p87
      %p89 = scmp.ne.s32.totalorder %s81, %s83
      %p90 = scmp.eq.s32.totalorder %s17, 3
      %p91 = por %p89, %p90
      %p92 = scmp.ne.s32.totalorder %s83, %s84
      %p93 = scmp.eq.s32.totalorder %s17, 0
      %p94 = por %p92, %p93
      %p95 = scmp.ne.s32.totalorder %s83, %s84
      %p96 = scmp.eq.s32.totalorder %s18, 3
      %p97 = por %p95, %p96
      %p99 = scmp.ne.s32.totalorder %s84, %s98
      %p100 = scmp.eq.s32.totalorder %s18, 0
      %p101 = por %p99, %p100
      %s102 = ssub.s32 %s19, %s31
      %s103 = ssub.s32 %s20, %s27
      %s104 = sor.u32 %s102, %s103
      %p105 = scmp.eq.s32.totalorder %s104, 0
      %s107 = sadd.s32 %s106, 1
      %s108 = scalar_select %p105, %s106, %s107
      %p111 = pneg %p105
      %p112 = scmp.eq.s32.totalorder %s12, 3
      %p113 = por %p111, %p112
      %p114 = scmp.ne.s32.totalorder %s106, %s109
      %p115 = scmp.eq.s32.totalorder %s12, 0
      %p116 = por %p114, %p115
      %p117 = scmp.ne.s32.totalorder %s106, %s109
      %p118 = scmp.eq.s32.totalorder %s17, 3
      %p119 = por %p117, %p118
      %p120 = scmp.ne.s32.totalorder %s109, %s110
      %p121 = scmp.eq.s32.totalorder %s17, 0
      %p122 = por %p120, %p121
      %p123 = scmp.ne.s32.totalorder %s109, %s110
      %p124 = scmp.eq.s32.totalorder %s18, 3
      %p125 = por %p123, %p124
      %p127 = scmp.ne.s32.totalorder %s110, %s126
      %p128 = scmp.eq.s32.totalorder %s18, 0
      %p129 = por %p127, %p128
      %p130 = scmp.le.s32.totalorder 1, %s12
      %p131 = scmp.lt.s32.totalorder %s12, 5
      %p132 = pnand %p130, %p131
      %p133 = pneg %p132
      // Predicated region
      $region9: #{tpu_custom_call.1} parent=5 // pred_check
        _
      $region10: #{tpu_custom_call.1} parent=5 // pred_check_branch
        %135 = sbr.rel (%p132) target = $region12
      $region11: #{tpu_custom_call.1} parent=5 // pred_region
        %s136 = ssub.s32 %s12, 1
        // Predicated region
        $region13: #{tpu_custom_call.1} parent=11 // pred_check
          %p137 = pneg %p73
        $region14: #{tpu_custom_call.1} parent=11 // pred_check_branch
          %139 = sbr.rel (%p137) target = $region16
        $region15: #{tpu_custom_call.1} parent=11 // pred_region
          _
        $region16: #{tpu_custom_call.1} parent=11 // pred_fallthru
          _
        // Predicated region
        $region17: #{tpu_custom_call.1} parent=11 // pred_check
          %p140 = pneg %p94
        $region18: #{tpu_custom_call.1} parent=11 // pred_check_branch
          %142 = sbr.rel (%p140) target = $region20
        $region19: #{tpu_custom_call.1} parent=11 // pred_region
          _
        $region20: #{tpu_custom_call.1} parent=11 // pred_fallthru
          _
      $region12: #{tpu_custom_call.1} parent=5 // pred_fallthru
        _
      %p143 = scmp.lt.s32.totalorder %s12, 4
      // Predicated region
      $region21: #{tpu_custom_call.1} parent=5 // pred_check
        %p144 = pneg %p143
      $region22: #{tpu_custom_call.1} parent=5 // pred_check_branch
        %146 = sbr.rel (%p144) target = $region24
      $region23: #{tpu_custom_call.1} parent=5 // pred_region
        // Predicated region
        $region25: #{tpu_custom_call.1} parent=23 // pred_check
          %p147 = pneg %p46
        $region26: #{tpu_custom_call.1} parent=23 // pred_check_branch
          %149 = sbr.rel (%p147) target = $region28
        $region27: #{tpu_custom_call.1} parent=23 // pred_region
          %p150 = scmp.lt.s32.totalorder %s19, 1
          %s151 = scalar_select %p150, %s19, 1
          %p152 = scmp.lt.s32.totalorder %s20, 1
          %s153 = scalar_select %p152, %s20, 1
          %s154 = smul.addr %s151, 2
          %s155 = sadd.s32 %s153, %s154
          %s156 = smul.addr %s155, 4
          %s157 = scalar_lea.vmem %s0, %s156
        $region28: #{tpu_custom_call.1} parent=23 // pred_fallthru
          _
      $region24: #{tpu_custom_call.1} parent=5 // pred_fallthru
        _
      %p158 = scmp.le.s32.totalorder 1, %s12
      %p159 = scmp.lt.s32.totalorder %s12, 5
      %p160 = pnand %p158, %p159
      %p161 = pneg %p160
      // Predicated region
      $region29: #{tpu_custom_call.1} parent=5 // pred_check
        _
      $region30: #{tpu_custom_call.1} parent=5 // pred_check_branch
        %163 = sbr.rel (%p160) target = $region32
      $region31: #{tpu_custom_call.1} parent=5 // pred_region
        %s164 = ssub.s32 %s12, 1
        %p165 = scmp.lt.s32.totalorder %s21, 1
        %s166 = scalar_select %p165, %s21, 1
        %p167 = scmp.lt.s32.totalorder %s22, 1
        %s168 = scalar_select %p167, %s22, 1
        %s169 = smul.addr %s166, 2
        %s170 = sadd.s32 %s168, %s169
        %s171 = smul.addr %s170, 4
        %s172 = scalar_lea.vmem %s0, %s171
        %p173 = pneg %p52
        %p174 = pneg %p49
        %p175 = pneg %p73
        %p176 = pneg %p70
        %p177 = pneg %p94
        %p178 = pneg %p91
        %p179 = pneg %p122
        %p180 = pneg %p119
        %s181 = sand.u32 %s109, 1
        %s182 = scalar_lea.sflag [#allocation3], %s181
        %s183 = sand.u32 %s109, 1
        %s184 = smul.addr %s183, 32
        %s185 = scalar_lea.vmem [#allocation2], %s184
        %p186 = scmp.lt.s32.totalorder %s21, 1
        %s187 = scalar_select %p186, %s21, 1
        %p188 = scmp.lt.s32.totalorder %s22, 1
        %s189 = scalar_select %p188, %s22, 1
        %s190 = smul.addr %s187, 2
        %s191 = sadd.s32 %s189, %s190
        %s192 = smul.addr %s191, 4
        %s193 = scalar_lea.vmem %s0, %s192
        %v194 = vld [vmem:[%s1] sm:$0xff]
        %v195 = vld [vmem:[%s1 + $0x8] sm:$0xff]
        %v196 = vld [vmem:[%s1 + $0x10] sm:$0xff]
        %v197 = vld [vmem:[%s1 + $0x18] sm:$0xff]
        %v198 = vld [vmem:[%s193] sm:$0xf]
        %v199 = vld [vmem:[%s2] sm:$0xff]
        %v200 = vld [vmem:[%s2 + $0x8] sm:$0xff]
        %v201 = vld [vmem:[%s2 + $0x10] sm:$0xff]
        %v202 = vld [vmem:[%s2 + $0x18] sm:$0xff]
        %204 = vset.pattern.permute.xlu0 0
        %205 = vperm.xlu0 %204, %v199
        %v206 = vpop.permute.xlu0 %205
        %209 = vset.pattern.permute.xlu0 0
        %210 = vperm.xlu0 %209, %v200
        %v211 = vpop.permute.xlu0 %210
        %214 = vset.pattern.permute.xlu0 0
        %215 = vperm.xlu0 %214, %v201
        %v216 = vpop.permute.xlu0 %215
        %219 = vset.pattern.permute.xlu0 0
        %220 = vperm.xlu0 %219, %v202
        %v221 = vpop.permute.xlu0 %220
        %vm223 = vcmask 31744
        %v225 = vsel %vm223, %v194, 0
        %v228 = vsel %vm223, %v195, 0
        %v231 = vsel %vm223, %v196, 0
        %v234 = vsel %vm223, %v197, 0
        %vm236 = vcmask 1043456
        %v238 = vsel %vm236, %v198, 0
        %240 = vmatprep.subr.mxu0 0.0
        %241 = vmatpush1.msra.mxu0 0.0
        %242 = vmatprep.subr.mxu0 0.0
        %243 = vmatpush1.msra.mxu0 0.0
        %244 = vmatprep.subr.mxu0 0.0
        %245 = vmatpush1.msra.mxu0 0.0
        %246 = vmatprep.subr.mxu0 0.0
        %247 = vmatpush1.msra.mxu0 0.0
        %248 = vmatprep.subr.mxu0 0.0
        %249 = vmatpush1.msra.mxu0 0.0
        %250 = vmatprep.subr.mxu0 0.0
        %251 = vmatpush1.msra.mxu0 0.0
        %252 = vmatprep.subr.mxu0 0.0
        %253 = vmatpush1.msra.mxu0 0.0
        %254 = vmatprep.subr.mxu0 0.0
        %255 = vmatpush1.msra.mxu0 0.0
        %256 = vmatprep.subr.mxu0 0.0
        %257 = vmatpush1.msra.mxu0 0.0
        %258 = vmatprep.subr.mxu0 0.0
        %259 = vmatpush1.msra.mxu0 0.0
        %260 = vmatprep.subr.mxu0 0.0
        %261 = vmatpush1.msra.mxu0 0.0
        %262 = vmatprep.subr.mxu0 0.0
        %263 = vmatpush1.msra.mxu0 0.0
        %264 = vmatprep.subr.mxu0 0.0
        %265 = vmatpush1.msra.mxu0 0.0
        %266 = vmatprep.subr.mxu0 0.0
        %267 = vmatpush1.msra.mxu0 0.0
        %268 = vmatprep.subr.mxu0 0.0
        %269 = vmatpush1.msra.mxu0 0.0
        %270 = vmatprep.subr.mxu0 0.0
        %271 = vmatpush1.msra.mxu0 %v238
        %272 = vmatprep.subr.mxu0 0.0
        %273 = vmatpush2.msra.mxu0 0.0
        %274 = vmatprep.subr.mxu0 0.0
        %275 = vmatpush2.msra.mxu0 0.0
        %276 = vmatprep.subr.mxu0 0.0
        %277 = vmatpush2.msra.mxu0 0.0
        %278 = vmatprep.subr.mxu0 0.0
        %279 = vmatpush2.msra.mxu0 0.0
        %280 = vmatprep.subr.mxu0 0.0
        %281 = vmatpush2.msra.mxu0 0.0
        %282 = vmatprep.subr.mxu0 0.0
        %283 = vmatpush2.msra.mxu0 0.0
        %284 = vmatprep.subr.mxu0 0.0
        %285 = vmatpush2.msra.mxu0 0.0
        %286 = vmatprep.subr.mxu0 0.0
        %287 = vmatpush2.msra.mxu0 0.0
        %288 = vmatprep.subr.mxu0 0.0
        %289 = vmatpush2.msra.mxu0 0.0
        %290 = vmatprep.subr.mxu0 0.0
        %291 = vmatpush2.msra.mxu0 0.0
        %292 = vmatprep.subr.mxu0 0.0
        %293 = vmatpush2.msra.mxu0 0.0
        %294 = vmatprep.subr.mxu0 0.0
        %295 = vmatpush2.msra.mxu0 0.0
        %296 = vmatprep.subr.mxu0 0.0
        %297 = vmatpush2.msra.mxu0 0.0
        %298 = vmatprep.subr.mxu0 0.0
        %299 = vmatpush2.msra.mxu0 0.0
        %300 = vmatprep.subr.mxu0 0.0
        %301 = vmatpush2.msra.mxu0 0.0
        %302 = vmatprep.subr.mxu0 0.0
        %303 = vmatpush2.msra.mxu0 0.0
        %304 = vmatprep.mubr.f32.mxu0 0.0
        %305 = vmatmul.mubr.f32.gmra.mxu0 %v225
        %v306 = vpop.f32.mrf.mxu0
        %v307 = vadd.f32 %v206, %v306
        %v308 = vpop.f32.mrf.mxu0
        %309 = vmatprep.mubr.f32.mxu0 0.0
        %310 = vmatmul.mubr.f32.gmra.mxu0 %v228
        %v311 = vpop.f32.mrf.mxu0
        %v312 = vadd.f32 %v211, %v311
        %v313 = vpop.f32.mrf.mxu0
        %314 = vmatprep.mubr.f32.mxu0 0.0
        %315 = vmatmul.mubr.f32.gmra.mxu0 %v231
        %v316 = vpop.f32.mrf.mxu0
        %v317 = vadd.f32 %v216, %v316
        %v318 = vpop.f32.mrf.mxu0
        %319 = vmatprep.mubr.f32.mxu0 0.0
        %320 = vmatmul.mubr.f32.gmra.mxu0 %v234
        %v321 = vpop.f32.mrf.mxu0
        %v322 = vadd.f32 %v221, %v321
        %v323 = vpop.f32.mrf.mxu0
        %324 = vdwg.mxu0
        %325 = vst [vmem:[%s185] sm:$0xff] %v307
        %326 = vst [vmem:[%s185 + $0x8] sm:$0xff] %v312
        %327 = vst [vmem:[%s185 + $0x10] sm:$0xff] %v317
        %328 = vst [vmem:[%s185 + $0x18] sm:$0xff] %v322
        %s329 = sand.u32 %s109, 1
        %s330 = scalar_lea.sflag [#allocation3], %s329
        %s331 = sand.u32 %s109, 1
        %s332 = smul.addr %s331, 32
        %s333 = scalar_lea.vmem [#allocation2], %s332
        // Predicated region
        $region33: #{tpu_custom_call.1} parent=31 // pred_check
          %p334 = pneg %p119
        $region34: #{tpu_custom_call.1} parent=31 // pred_check_branch
          %336 = sbr.rel (%p334) target = $region36
        $region35: #{tpu_custom_call.1} parent=31 // pred_region
          %s338 = ssub.s32 512, 512
          %339 = vsyncadd %s330, %s338
          %s340 = smul.addr %s21, 8
          %s341 = sadd.s32 %s22, %s340
          %s342 = smul.addr %s341, 128
          %s343 = scalar_lea.hbm %s3, %s342
          %s344 = sshll.u32 %s333, 4
          %s345 = int_to_ptr.vmem [resolvable:$true] %s344
          %350 = dma.vmem_to_hbm [thread:$0]  %s345, 512, %s343, %s330, 128, 256, 8
        $region36: #{tpu_custom_call.1} parent=31 // pred_fallthru
          _
      $region32: #{tpu_custom_call.1} parent=5 // pred_fallthru
        _
      %p351 = scmp.le.s32.totalorder 2, %s12
      // Predicated region
      $region37: #{tpu_custom_call.1} parent=5 // pred_check
        %p352 = pneg %p351
      $region38: #{tpu_custom_call.1} parent=5 // pred_check_branch
        %354 = sbr.rel (%p352) target = $region40
      $region39: #{tpu_custom_call.1} parent=5 // pred_region
        %s355 = ssub.s32 %s12, 2
        // Predicated region
        $region41: #{tpu_custom_call.1} parent=39 // pred_check
          %p356 = pneg %p125
        $region42: #{tpu_custom_call.1} parent=39 // pred_check_branch
          %358 = sbr.rel (%p356) target = $region44
        $region43: #{tpu_custom_call.1} parent=39 // pred_region
          %s359 = sand.u32 %s110, 1
          %s360 = scalar_lea.sflag [#allocation3], %s359
          %s361 = sand.u32 %s110, 1
          %s362 = smul.addr %s361, 32
          %s363 = scalar_lea.vmem [#allocation2], %s362
          %364 = dma.done %s360, 512
        $region44: #{tpu_custom_call.1} parent=39 // pred_fallthru
          _
      $region40: #{tpu_custom_call.1} parent=5 // pred_fallthru
        _
    $region6: #{tpu_custom_call.1} parent=1 // loop_footer
      %s16 = sadd.s32 1, %s12
    $region7: #{tpu_custom_call.1} parent=1 // loop_footer_branch
      %11 = sbr.rel target = $region3
    $region8: #{tpu_custom_call.1} parent=1 // loop_exit
      _
    %365 = vsyncpa [#allocation3], 1
    %s366 = scalar_lea.sflag [#allocation3], 1
    %367 = vsyncpa %s366, 1

</llo_original>
